<compile_context>
chip_gen: v6e
topology: v6e:2x2x1
jax: 0.10.0
libtpu: 0.0.40
codegen_flags: <defaults>
</compile_context>

<pallas_src>
import math

import jax
import jax.numpy as jnp
from jax.experimental import pallas as pl
from jax.experimental.pallas import tpu as pltpu


def _round_up(n, m):
    return ((n + m - 1) // m) * m


def _sinusoidal_kernel(x_ref, w_ref, b_ref, o_ref):
    # x_ref: (1, TB)      f32  -- batch on lanes
    # w_ref: (2*hd, 1)    f32  -- [2*pi*w, 2*pi*w] on sublanes (resident)
    # b_ref: (2*hd, 1)    f32  -- phase bias: 0 for sin half, pi/2 for cos half
    # o_ref: (1+2*hd, TB)      -- row 0: x, rows 1..2*hd: [sin | cos]
    x = x_ref[...]                                   # (1, TB)
    o_ref[0:1, :] = x.astype(o_ref.dtype)
    phase = w_ref[...] * x + b_ref[...]              # (2*hd, TB) VPU broadcast FMA
    # Single EUP pass + single contiguous store covers both sin and cos halves.
    o_ref[1:, :] = jnp.sin(phase).astype(o_ref.dtype)


def learned_sinusoidal_pos_emb(x, weights, *, max_lanes_per_block=16384,
                               out_dtype=jnp.float32, transposed=False):
    """x: (B,) float, weights: (half_dim,) float.

    Returns (B, 1 + 2*half_dim) in `out_dtype` (or (1 + 2*half_dim, B) if
    transposed=True, which is the kernel's native lane-dense layout).
    """
    b = int(x.shape[0])
    hd = int(weights.shape[0])
    out_dim = 1 + 2 * hd

    # Lane tile: multiple of 128; >=2 blocks when B allows (v7x megacore),
    # capped so each block is MB-scale but far under v5e's 16 MiB scoped VMEM.
    cap = _round_up(max(max_lanes_per_block, 128), 128)
    tb = min(cap, max(128, _round_up(pl.cdiv(b, 2), 128)))
    b_pad = _round_up(b, tb)
    grid = (b_pad // tb,)

    # Only the tiny (1, B) input gets padded; padded lanes compute sin(bias)
    # and are dropped by the final slice.
    x_lanes = x.astype(jnp.float32).reshape(1, b)
    if b_pad != b:
        x_lanes = jnp.pad(x_lanes, ((0, 0), (0, b_pad - b)))

    # Fold 2*pi into the weights once; duplicate them and add a pi/2 phase for
    # the cos half so the kernel needs a single sin() pass.
    w32 = weights.astype(jnp.float32) * (2.0 * math.pi)
    w_cat = jnp.concatenate([w32, w32]).reshape(2 * hd, 1)
    bias = jnp.concatenate(
        [jnp.zeros((hd,), jnp.float32),
         jnp.full((hd,), 0.5 * math.pi, jnp.float32)]).reshape(2 * hd, 1)

    cost = pl.CostEstimate(
        flops=2 * b_pad * 2 * hd,                       # mul + add per element
        transcendentals=b_pad * 2 * hd,                 # one sin per element
        bytes_accessed=4 * (b_pad + 4 * hd)
        + b_pad * out_dim * jnp.dtype(out_dtype).itemsize)

    out = pl.pallas_call(
        _sinusoidal_kernel,
        out_shape=jax.ShapeDtypeStruct((out_dim, b_pad), out_dtype),
        grid=grid,
        in_specs=[
            pl.BlockSpec((1, tb), lambda i: (0, i)),        # x, lane-tiled
            pl.BlockSpec((2 * hd, 1), lambda i: (0, 0)),    # weights, resident
            pl.BlockSpec((2 * hd, 1), lambda i: (0, 0)),    # phase bias, resident
        ],
        out_specs=pl.BlockSpec((out_dim, tb), lambda i: (0, i)),
        compiler_params=pltpu.CompilerParams(
            # Independent lane blocks -> shard across TensorCores on v7x.
            dimension_semantics=("parallel",)),
        cost_estimate=cost,
    )(x_lanes, w_cat, bias)

    if transposed:
        return out[:, :b] if b_pad != b else out
    # Match the PyTorch module layout (B, 1 + 2*half_dim); slice + transpose
    # fuse into a single XLA op.
    return out[:, :b].T


def _reference(x, weights):
    x2 = x.reshape(-1, 1).astype(jnp.float32)
    freqs = x2 * weights.reshape(1, -1).astype(jnp.float32) * 2.0 * math.pi
    return jnp.concatenate([x2, jnp.sin(freqs), jnp.cos(freqs)], axis=-1)


if __name__ == "__main__":
    key = jax.random.PRNGKey(0)
    k_x, k_w = jax.random.split(key)

    B = 8          # batch of scalar diffusion timesteps
    DIM = 32       # must be even; half_dim = 16
    half_dim = DIM // 2

    # Deterministic parameter init (torch.randn(half_dim) analogue).
    weights = jax.random.normal(k_w, (half_dim,), dtype=jnp.float32)
    # Example input: a batch of scalar times in [0, 1].
    x = jax.random.uniform(k_x, (B,), dtype=jnp.float32)

    out = jax.block_until_ready(learned_sinusoidal_pos_emb(x, weights))
    ref = _reference(x, weights)
    assert out.shape == (B, 1 + 2 * half_dim), out.shape
    assert jnp.allclose(out, ref, atol=2e-5, rtol=2e-5), "mismatch vs reference"

    # Exercise the multi-block + padded path (B not a multiple of the tile).
    B2 = 300
    x2 = jax.random.uniform(jax.random.PRNGKey(1), (B2,), dtype=jnp.float32)
    out2 = jax.block_until_ready(learned_sinusoidal_pos_emb(x2, weights))
    ref2 = _reference(x2, weights)
    assert out2.shape == (B2, 1 + 2 * half_dim), out2.shape
    assert jnp.allclose(out2, ref2, atol=2e-5, rtol=2e-5), "mismatch (padded/tiled)"

    # Native lane-dense layout for downstream consumers that can use it.
    out_t = jax.block_until_ready(
        learned_sinusoidal_pos_emb(x2, weights, transposed=True))
    assert out_t.shape == (1 + 2 * half_dim, B2), out_t.shape
    assert jnp.allclose(out_t.T, ref2, atol=2e-5, rtol=2e-5), "mismatch (transposed)"

    print("KERNEL_OK")
</pallas_src>

<mosaic_0001>
module attributes {stable_mosaic.version = 11 : i64} {
  func.func @_sinusoidal_kernel(%arg0: i32, %arg1: memref<1x128xf32, #tpu.memory_space<vmem>>, %arg2: memref<32x1xf32, #tpu.memory_space<vmem>>, %arg3: memref<32x1xf32, #tpu.memory_space<vmem>>, %arg4: memref<33x128xf32, #tpu.memory_space<vmem>>) attributes {dimension_semantics = [#tpu.dimension_semantics<parallel>], iteration_bounds = array<i64: 1>, scalar_prefetch = 0 : i64, scratch_operands = 0 : i64, tpu.core_type = #tpu.core_type<tc>, window_params = [{transform_indices = @transform_0, window_bounds = array<i64: 1, 128>}, {pipeline_mode = #tpu.pipeline_mode<synchronous>, transform_indices = @transform_1, window_bounds = array<i64: 32, 1>}, {pipeline_mode = #tpu.pipeline_mode<synchronous>, transform_indices = @transform_2, window_bounds = array<i64: 32, 1>}, {transform_indices = @transform_3, window_bounds = array<i64: 33, 128>}]} {
    %c0 = arith.constant 0 : index
    %c0_0 = arith.constant 0 : index
    %0 = vector.load %arg1[%c0, %c0_0] : memref<1x128xf32, #tpu.memory_space<vmem>>, vector<1x128xf32>
    %c0_1 = arith.constant 0 : index
    %c0_2 = arith.constant 0 : index
    %1 = vector.load %arg4[%c0_1, %c0_2] : memref<33x128xf32, #tpu.memory_space<vmem>>, vector<1x128xf32>
    tpu.vector_store %arg4[%c0_1, %c0_2], %0 {strides = array<i32>} : memref<33x128xf32, #tpu.memory_space<vmem>>, vector<1x128xf32>,
    %c0_3 = arith.constant 0 : index
    %c0_4 = arith.constant 0 : index
    %2 = vector.load %arg2[%c0_3, %c0_4] : memref<32x1xf32, #tpu.memory_space<vmem>>, vector<32x1xf32>
    %3 = vector.broadcast %2 : vector<32x1xf32> to vector<32x128xf32>
    %4 = vector.broadcast %0 : vector<1x128xf32> to vector<32x128xf32>
    %5 = arith.mulf %3, %4 : vector<32x128xf32>
    %c0_5 = arith.constant 0 : index
    %c0_6 = arith.constant 0 : index
    %6 = vector.load %arg3[%c0_5, %c0_6] : memref<32x1xf32, #tpu.memory_space<vmem>>, vector<32x1xf32>
    %7 = vector.broadcast %6 : vector<32x1xf32> to vector<32x128xf32>
    %8 = arith.addf %5, %7 : vector<32x128xf32>
    %9 = math.sin %8 : vector<32x128xf32>
    %c1 = arith.constant 1 : index
    %c0_7 = arith.constant 0 : index
    %10 = vector.load %arg4[%c1, %c0_7] : memref<33x128xf32, #tpu.memory_space<vmem>>, vector<32x128xf32>
    tpu.vector_store %arg4[%c1, %c0_7], %9 {strides = array<i32>} : memref<33x128xf32, #tpu.memory_space<vmem>>, vector<32x128xf32>,
    return
  }
  func.func @transform_0(%arg0: i32) -> (i32, i32) {
    %c0_i32 = arith.constant 0 : i32
    %c0_i32_0 = arith.constant 0 : i32
    return %c0_i32, %arg0 : i32, i32
  }
  func.func @transform_1(%arg0: i32) -> (i32, i32) {
    %c0_i32 = arith.constant 0 : i32
    %c0_i32_0 = arith.constant 0 : i32
    %c0_i32_1 = arith.constant 0 : i32
    return %c0_i32, %c0_i32_0 : i32, i32
  }
  func.func @transform_2(%arg0: i32) -> (i32, i32) {
    %c0_i32 = arith.constant 0 : i32
    %c0_i32_0 = arith.constant 0 : i32
    %c0_i32_1 = arith.constant 0 : i32
    return %c0_i32, %c0_i32_0 : i32, i32
  }
  func.func @transform_3(%arg0: i32) -> (i32, i32) {
    %c0_i32 = arith.constant 0 : i32
    %c0_i32_0 = arith.constant 0 : i32
    return %c0_i32, %arg0 : i32, i32
  }
}

</mosaic_0001>

<llo_original>
// kernel: tpu_custom_call.1
$region0: #{tpu_custom_call.1}
  #allocation0 [shape = 'u32[]', space=smem, size = 0x4, offset = 0x4, fixed_abs, tag = 'smem constant byte address 0x4 - core index']
  #allocation1 [shape = 'u32[144,128]{1,0:T(1,128)}', space=vmem, size = 0x12000, scoped, tag = 'internal scratch']
  %s0 = inlined_call_operand.vmem [shape: f32[1,128], index: 0, kind: input, shape index: {}]
  %s1 = inlined_call_operand.vmem [shape: f32[32,1], index: 1, kind: input, shape index: {}]
  %s2 = inlined_call_operand.vmem [shape: f32[32,1], index: 2, kind: input, shape index: {}]
  %s3 = inlined_call_operand.hbm [shape: f32[33,128], index: 3, kind: output, shape index: {}]
  %s4 = sld [smem:[#allocation0]]
  $region22: #{tpu_custom_call.1} parent=0
    _
  %s6 = ssub.s32 1, %s4
  %s7 = scalar_select 0, %s6, %s4
  $region1: #{tpu_custom_call.1} parent=0
    #allocation2 [shape = 'u8[20480]{0}', space=vmem, size = 0x5000, scoped, tag = 'output window, operand 0, single buffered']
    #allocation3 [shape = 's32[1]{0}', space=sflag, size = 0x4, scoped, tag = 'scoped memory for tpu_custom_call.1']
    %8 = vsyncpa [#allocation3], 0
    // Predicated region
    $region2: #{tpu_custom_call.1} parent=1 // pred_check
      _
    $region3: #{tpu_custom_call.1} parent=1 // pred_check_branch
      %10 = sbr.rel (0) target = $region5
    $region4: #{tpu_custom_call.1} parent=1 // pred_region
      _
    $region5: #{tpu_custom_call.1} parent=1 // pred_fallthru
      _
    // Predicated region
    $region6: #{tpu_custom_call.1} parent=1 // pred_check
      _
    $region7: #{tpu_custom_call.1} parent=1 // pred_check_branch
      %12 = sbr.rel (0) target = $region9
    $region8: #{tpu_custom_call.1} parent=1 // pred_region
      _
    $region9: #{tpu_custom_call.1} parent=1 // pred_fallthru
      _
    // Predicated region
    $region10: #{tpu_custom_call.1} parent=1 // pred_check
      _
    $region11: #{tpu_custom_call.1} parent=1 // pred_check_branch
      %14 = sbr.rel (0) target = $region13
    $region12: #{tpu_custom_call.1} parent=1 // pred_region
      _
    $region13: #{tpu_custom_call.1} parent=1 // pred_fallthru
      _
    %v15 = vld [vmem:[%s0] sm:$0x1]
    %16 = vst [vmem:[#allocation2] sm:$0x1] %v15
    %v17 = vld [vmem:[%s1] sm:$0xff]
    %v18 = vld [vmem:[%s1 + $0x8] sm:$0xff]
    %v19 = vld [vmem:[%s1 + $0x10] sm:$0xff]
    %v20 = vld [vmem:[%s1 + $0x18] sm:$0xff]
    %22 = vset.pattern.permute.xlu0 0
    %23 = vperm.xlu0 %22, %v17
    %v24 = vpop.permute.xlu0 %23
    %27 = vset.pattern.permute.xlu0 0
    %28 = vperm.xlu0 %27, %v18
    %v29 = vpop.permute.xlu0 %28
    %32 = vset.pattern.permute.xlu0 0
    %33 = vperm.xlu0 %32, %v19
    %v34 = vpop.permute.xlu0 %33
    %37 = vset.pattern.permute.xlu0 0
    %38 = vperm.xlu0 %37, %v20
    %v39 = vpop.permute.xlu0 %38
    %v42 = vlaneseq
    %v43 = vshrl.u32 %v42, 7
    %v44 = vsub.s32 0, %v43
    %v45 = vrot.slane %v15, %v44
    %v47 = vmul.f32 %v24, %v45
    %v48 = vmul.f32 %v29, %v45
    %v49 = vmul.f32 %v34, %v45
    %v50 = vmul.f32 %v39, %v45
    %v51 = vld [vmem:[%s2] sm:$0xff]
    %v52 = vld [vmem:[%s2 + $0x8] sm:$0xff]
    %v53 = vld [vmem:[%s2 + $0x10] sm:$0xff]
    %v54 = vld [vmem:[%s2 + $0x18] sm:$0xff]
    %56 = vset.pattern.permute.xlu0 0
    %57 = vperm.xlu0 %56, %v51
    %v58 = vpop.permute.xlu0 %57
    %61 = vset.pattern.permute.xlu0 0
    %62 = vperm.xlu0 %61, %v52
    %v63 = vpop.permute.xlu0 %62
    %66 = vset.pattern.permute.xlu0 0
    %67 = vperm.xlu0 %66, %v53
    %v68 = vpop.permute.xlu0 %67
    %71 = vset.pattern.permute.xlu0 0
    %72 = vperm.xlu0 %71, %v54
    %v73 = vpop.permute.xlu0 %72
    %v75 = vadd.f32 %v47, %v58
    %v76 = vadd.f32 %v48, %v63
    %v77 = vadd.f32 %v49, %v68
    %v78 = vadd.f32 %v50, %v73
    %v79 = vand.u32 2147483647, %v75
    %vm80 = vcmp.le.f32.partialorder %v79, 0.7853982
    %vm81 = vcmp.lt.s32.totalorder %v75, 0
    %v82 = vand.u32 %v75, 2139095040
    %v83 = vshrl.u32 %v82, 23
    %v84 = vsub.s32 %v83, 127
    %v85 = vand.u32 2147483647, %v75
    %v86 = vand.u32 %v85, 8388607
    %v87 = vor.u32 %v86, 8388608
    %v88 = vsub.s32 0, %v87
    %v89 = vadd.s32 %v84, 1
    %vm90 = vcmp.gt.s32.totalorder %v89, 0
    %v91 = vsel %vm90, %v89, 0
    %v92 = vshrl.u32 %v91, 5
    %v93 = vand.u32 %v91, 31
    %v94 = vsub.s32 32, %v93
    %v95 = vshrl.u32 683565275, %v94
    %v96 = vshll.u32 683565275, %v93
    %v97 = vshrl.u32 2475754826, %v94
    %v98 = vor.u32 %v96, %v97
    %v99 = vshll.u32 2475754826, %v93
    %v100 = vshrl.u32 2131351028, %v94
    %v101 = vor.u32 %v99, %v100
    %v102 = vshll.u32 2131351028, %v93
    %v103 = vshrl.u32 2102212464, %v94
    %v104 = vor.u32 %v102, %v103
    %v105 = vshll.u32 2102212464, %v93
    %v106 = vshrl.u32 920167782, %v94
    %v107 = vor.u32 %v105, %v106
    %v108 = vshll.u32 920167782, %v93
    %v109 = vshrl.u32 1326507024, %v94
    %v110 = vor.u32 %v108, %v109
    %vm111 = vcmp.lt.s32.totalorder %v92, 1
    %vm112 = vcmp.lt.s32.totalorder %v92, 2
    %vm113 = vcmp.lt.s32.totalorder %v92, 3
    %vm114 = vcmp.lt.s32.totalorder %v92, 4
    %v115 = vsel %vm111, %v95, %v98
    %v116 = vsel %vm114, %v104, 2102212464
    %v117 = vsel %vm113, %v101, %v116
    %v118 = vsel %vm112, %v115, %v117
    %v119 = vsel %vm111, %v98, %v101
    %v120 = vsel %vm114, %v107, 920167782
    %v121 = vsel %vm113, %v104, %v120
    %v122 = vsel %vm112, %v119, %v121
    %v123 = vsel %vm111, %v101, %v104
    %v124 = vsel %vm114, %v110, 1326507024
    %v125 = vsel %vm113, %v107, %v124
    %v126 = vsel %vm112, %v123, %v125
    %v127 = vshll.u32 %v87, 8
    %v128 = vmul.u32.u64.compose %v127, %v126
    %v129 = vextract.low.u32 %v128
    %v130 = vextract.high.u32 %v128
    %v131 = vmul.u32.u64.compose %v127, %v122
    %v132 = vextract.low.u32 %v131
    %v133 = vextract.high.u32 %v131
    %v134 = vmul.u32 %v127, %v118
    %v135 = vadd.s32 %v130, %v132
    %vm136 = vc.u32 %v130, %v132
    %v137 = vadd.s32 %v133, 1
    %v138 = vsel %vm136, %v137, %v133
    %v139 = vadd.s32 %v134, %v138
    %v140 = vadd.s32 %v139, 536870912
    %v141 = vshrl.u32 %v140, 30
    %v142 = vshll.u32 %v141, 30
    %v143 = vsub.s32 %v139, %v142
    %vm144 = vcmp.lt.s32.totalorder %v143, 0
    %v145 = vsub.s32 0, %v143
    %v146 = vsel %vm144, %v145, %v143
    %v147 = vclz %v146
    %v148 = vsub.s32 %v147, 2
    %vm149 = vcmp.gt.s32.totalorder 0, %v148
    %v150 = vsel %vm149, 0, %v148
    %v151 = vsub.s32 32, %v150
    %v152 = vshll.u32 %v143, %v150
    %v153 = vshrl.u32 %v135, %v151
    %v154 = vor.u32 %v152, %v153
    %v155 = vsub.s32 4294967266, %v150
    %v156 = vadd.s32 %v155, 127
    %v157 = vshll.u32 %v156, 23
    %v158 = vor.u32 4788187, %v157
    %v159 = vand.u32 2147483647, %v158
    %v161 = vcvt.s32.f32 %v154
    %v162 = vmul.f32 %v161, %v159
    %v163 = vxor.u32 %v162, 2147483648
    %v164 = vsel %vm81, %v163, %v162
    %v165 = vsub.s32 4, %v141
    %v166 = vsel %vm81, %v165, %v141
    %v167 = vsel %vm80, %v75, %v164
    %v168 = vsel %vm80, 0, %v166
    %v169 = vcosq.f32.pop %v167
    %v170 = vsinq.f32.pop %v167
    %vm171 = vweird.f32 %v75
    %v172 = vadd.s32 %v168, 3
    %v173 = vand.u32 %v172, 3
    %vm174 = vcmp.lt.s32.totalorder %v173, 2
    %vm175 = vcmp.eq.s32.totalorder %v173, 0
    %v176 = vxor.u32 %v170, 2147483648
    %v177 = vsel %vm175, %v169, %v176
    %vm178 = vcmp.eq.s32.totalorder %v173, 2
    %v179 = vxor.u32 %v169, 2147483648
    %v180 = vsel %vm178, %v179, %v170
    %v181 = vsel %vm174, %v177, %v180
    %v182 = vsel %vm171, nan, %v181
    %v183 = vand.u32 2147483647, %v76
    %vm184 = vcmp.le.f32.partialorder %v183, 0.7853982
    %vm185 = vcmp.lt.s32.totalorder %v76, 0
    %v186 = vand.u32 %v76, 2139095040
    %v187 = vshrl.u32 %v186, 23
    %v188 = vsub.s32 %v187, 127
    %v189 = vand.u32 2147483647, %v76
    %v190 = vand.u32 %v189, 8388607
    %v191 = vor.u32 %v190, 8388608
    %v192 = vsub.s32 0, %v191
    %v193 = vadd.s32 %v188, 1
    %vm194 = vcmp.gt.s32.totalorder %v193, 0
    %v195 = vsel %vm194, %v193, 0
    %v196 = vshrl.u32 %v195, 5
    %v197 = vand.u32 %v195, 31
    %v198 = vsub.s32 32, %v197
    %v199 = vshrl.u32 683565275, %v198
    %v200 = vshll.u32 683565275, %v197
    %v201 = vshrl.u32 2475754826, %v198
    %v202 = vor.u32 %v200, %v201
    %v203 = vshll.u32 2475754826, %v197
    %v204 = vshrl.u32 2131351028, %v198
    %v205 = vor.u32 %v203, %v204
    %v206 = vshll.u32 2131351028, %v197
    %v207 = vshrl.u32 2102212464, %v198
    %v208 = vor.u32 %v206, %v207
    %v209 = vshll.u32 2102212464, %v197
    %v210 = vshrl.u32 920167782, %v198
    %v211 = vor.u32 %v209, %v210
    %v212 = vshll.u32 920167782, %v197
    %v213 = vshrl.u32 1326507024, %v198
    %v214 = vor.u32 %v212, %v213
    %vm215 = vcmp.lt.s32.totalorder %v196, 1
    %vm216 = vcmp.lt.s32.totalorder %v196, 2
    %vm217 = vcmp.lt.s32.totalorder %v196, 3
    %vm218 = vcmp.lt.s32.totalorder %v196, 4
    %v219 = vsel %vm215, %v199, %v202
    %v220 = vsel %vm218, %v208, 2102212464
    %v221 = vsel %vm217, %v205, %v220
    %v222 = vsel %vm216, %v219, %v221
    %v223 = vsel %vm215, %v202, %v205
    %v224 = vsel %vm218, %v211, 920167782
    %v225 = vsel %vm217, %v208, %v224
    %v226 = vsel %vm216, %v223, %v225
    %v227 = vsel %vm215, %v205, %v208
    %v228 = vsel %vm218, %v214, 1326507024
    %v229 = vsel %vm217, %v211, %v228
    %v230 = vsel %vm216, %v227, %v229
    %v231 = vshll.u32 %v191, 8
    %v232 = vmul.u32.u64.compose %v231, %v230
    %v233 = vextract.low.u32 %v232
    %v234 = vextract.high.u32 %v232
    %v235 = vmul.u32.u64.compose %v231, %v226
    %v236 = vextract.low.u32 %v235
    %v237 = vextract.high.u32 %v235
    %v238 = vmul.u32 %v231, %v222
    %v239 = vadd.s32 %v234, %v236
    %vm240 = vc.u32 %v234, %v236
    %v241 = vadd.s32 %v237, 1
    %v242 = vsel %vm240, %v241, %v237
    %v243 = vadd.s32 %v238, %v242
    %v244 = vadd.s32 %v243, 536870912
    %v245 = vshrl.u32 %v244, 30
    %v246 = vshll.u32 %v245, 30
    %v247 = vsub.s32 %v243, %v246
    %vm248 = vcmp.lt.s32.totalorder %v247, 0
    %v249 = vsub.s32 0, %v247
    %v250 = vsel %vm248, %v249, %v247
    %v251 = vclz %v250
    %v252 = vsub.s32 %v251, 2
    %vm253 = vcmp.gt.s32.totalorder 0, %v252
    %v254 = vsel %vm253, 0, %v252
    %v255 = vsub.s32 32, %v254
    %v256 = vshll.u32 %v247, %v254
    %v257 = vshrl.u32 %v239, %v255
    %v258 = vor.u32 %v256, %v257
    %v259 = vsub.s32 4294967266, %v254
    %v260 = vadd.s32 %v259, 127
    %v261 = vshll.u32 %v260, 23
    %v262 = vor.u32 4788187, %v261
    %v263 = vand.u32 2147483647, %v262
    %v265 = vcvt.s32.f32 %v258
    %v266 = vmul.f32 %v265, %v263
    %v267 = vxor.u32 %v266, 2147483648
    %v268 = vsel %vm185, %v267, %v266
    %v269 = vsub.s32 4, %v245
    %v270 = vsel %vm185, %v269, %v245
    %v271 = vsel %vm184, %v76, %v268
    %v272 = vsel %vm184, 0, %v270
    %v273 = vcosq.f32.pop %v271
    %v274 = vsinq.f32.pop %v271
    %vm275 = vweird.f32 %v76
    %v276 = vadd.s32 %v272, 3
    %v277 = vand.u32 %v276, 3
    %vm278 = vcmp.lt.s32.totalorder %v277, 2
    %vm279 = vcmp.eq.s32.totalorder %v277, 0
    %v280 = vxor.u32 %v274, 2147483648
    %v281 = vsel %vm279, %v273, %v280
    %vm282 = vcmp.eq.s32.totalorder %v277, 2
    %v283 = vxor.u32 %v273, 2147483648
    %v284 = vsel %vm282, %v283, %v274
    %v285 = vsel %vm278, %v281, %v284
    %v286 = vsel %vm275, nan, %v285
    %v287 = vand.u32 2147483647, %v77
    %vm288 = vcmp.le.f32.partialorder %v287, 0.7853982
    %vm289 = vcmp.lt.s32.totalorder %v77, 0
    %v290 = vand.u32 %v77, 2139095040
    %v291 = vshrl.u32 %v290, 23
    %v292 = vsub.s32 %v291, 127
    %v293 = vand.u32 2147483647, %v77
    %v294 = vand.u32 %v293, 8388607
    %v295 = vor.u32 %v294, 8388608
    %v296 = vsub.s32 0, %v295
    %v297 = vadd.s32 %v292, 1
    %vm298 = vcmp.gt.s32.totalorder %v297, 0
    %v299 = vsel %vm298, %v297, 0
    %v300 = vshrl.u32 %v299, 5
    %v301 = vand.u32 %v299, 31
    %v302 = vsub.s32 32, %v301
    %v303 = vshrl.u32 683565275, %v302
    %v304 = vshll.u32 683565275, %v301
    %v305 = vshrl.u32 2475754826, %v302
    %v306 = vor.u32 %v304, %v305
    %v307 = vshll.u32 2475754826, %v301
    %v308 = vshrl.u32 2131351028, %v302
    %v309 = vor.u32 %v307, %v308
    %v310 = vshll.u32 2131351028, %v301
    %v311 = vshrl.u32 2102212464, %v302
    %v312 = vor.u32 %v310, %v311
    %v313 = vshll.u32 2102212464, %v301
    %v314 = vshrl.u32 920167782, %v302
    %v315 = vor.u32 %v313, %v314
    %v316 = vshll.u32 920167782, %v301
    %v317 = vshrl.u32 1326507024, %v302
    %v318 = vor.u32 %v316, %v317
    %vm319 = vcmp.lt.s32.totalorder %v300, 1
    %vm320 = vcmp.lt.s32.totalorder %v300, 2
    %vm321 = vcmp.lt.s32.totalorder %v300, 3
    %vm322 = vcmp.lt.s32.totalorder %v300, 4
    %v323 = vsel %vm319, %v303, %v306
    %v324 = vsel %vm322, %v312, 2102212464
    %v325 = vsel %vm321, %v309, %v324
    %v326 = vsel %vm320, %v323, %v325
    %v327 = vsel %vm319, %v306, %v309
    %v328 = vsel %vm322, %v315, 920167782
    %v329 = vsel %vm321, %v312, %v328
    %v330 = vsel %vm320, %v327, %v329
    %v331 = vsel %vm319, %v309, %v312
    %v332 = vsel %vm322, %v318, 1326507024
    %v333 = vsel %vm321, %v315, %v332
    %v334 = vsel %vm320, %v331, %v333
    %v335 = vshll.u32 %v295, 8
    %v336 = vmul.u32.u64.compose %v335, %v334
    %v337 = vextract.low.u32 %v336
    %v338 = vextract.high.u32 %v336
    %v339 = vmul.u32.u64.compose %v335, %v330
    %v340 = vextract.low.u32 %v339
    %v341 = vextract.high.u32 %v339
    %v342 = vmul.u32 %v335, %v326
    %v343 = vadd.s32 %v338, %v340
    %vm344 = vc.u32 %v338, %v340
    %v345 = vadd.s32 %v341, 1
    %v346 = vsel %vm344, %v345, %v341
    %v347 = vadd.s32 %v342, %v346
    %v348 = vadd.s32 %v347, 536870912
    %v349 = vshrl.u32 %v348, 30
    %v350 = vshll.u32 %v349, 30
    %v351 = vsub.s32 %v347, %v350
    %vm352 = vcmp.lt.s32.totalorder %v351, 0
    %v353 = vsub.s32 0, %v351
    %v354 = vsel %vm352, %v353, %v351
    %v355 = vclz %v354
    %v356 = vsub.s32 %v355, 2
    %vm357 = vcmp.gt.s32.totalorder 0, %v356
    %v358 = vsel %vm357, 0, %v356
    %v359 = vsub.s32 32, %v358
    %v360 = vshll.u32 %v351, %v358
    %v361 = vshrl.u32 %v343, %v359
    %v362 = vor.u32 %v360, %v361
    %v363 = vsub.s32 4294967266, %v358
    %v364 = vadd.s32 %v363, 127
    %v365 = vshll.u32 %v364, 23
    %v366 = vor.u32 4788187, %v365
    %v367 = vand.u32 2147483647, %v366
    %v369 = vcvt.s32.f32 %v362
    %v370 = vmul.f32 %v369, %v367
    %v371 = vxor.u32 %v370, 2147483648
    %v372 = vsel %vm289, %v371, %v370
    %v373 = vsub.s32 4, %v349
    %v374 = vsel %vm289, %v373, %v349
    %v375 = vsel %vm288, %v77, %v372
    %v376 = vsel %vm288, 0, %v374
    %v377 = vcosq.f32.pop %v375
    %v378 = vsinq.f32.pop %v375
    %vm379 = vweird.f32 %v77
    %v380 = vadd.s32 %v376, 3
    %v381 = vand.u32 %v380, 3
    %vm382 = vcmp.lt.s32.totalorder %v381, 2
    %vm383 = vcmp.eq.s32.totalorder %v381, 0
    %v384 = vxor.u32 %v378, 2147483648
    %v385 = vsel %vm383, %v377, %v384
    %vm386 = vcmp.eq.s32.totalorder %v381, 2
    %v387 = vxor.u32 %v377, 2147483648
    %v388 = vsel %vm386, %v387, %v378
    %v389 = vsel %vm382, %v385, %v388
    %v390 = vsel %vm379, nan, %v389
    %v391 = vand.u32 2147483647, %v78
    %vm392 = vcmp.le.f32.partialorder %v391, 0.7853982
    %vm393 = vcmp.lt.s32.totalorder %v78, 0
    %v394 = vand.u32 %v78, 2139095040
    %v395 = vshrl.u32 %v394, 23
    %v396 = vsub.s32 %v395, 127
    %v397 = vand.u32 2147483647, %v78
    %v398 = vand.u32 %v397, 8388607
    %v399 = vor.u32 %v398, 8388608
    %v400 = vsub.s32 0, %v399
    %v401 = vadd.s32 %v396, 1
    %vm402 = vcmp.gt.s32.totalorder %v401, 0
    %v403 = vsel %vm402, %v401, 0
    %v404 = vshrl.u32 %v403, 5
    %v405 = vand.u32 %v403, 31
    %v406 = vsub.s32 32, %v405
    %v407 = vshrl.u32 683565275, %v406
    %v408 = vshll.u32 683565275, %v405
    %v409 = vshrl.u32 2475754826, %v406
    %v410 = vor.u32 %v408, %v409
    %v411 = vshll.u32 2475754826, %v405
    %v412 = vshrl.u32 2131351028, %v406
    %v413 = vor.u32 %v411, %v412
    %v414 = vshll.u32 2131351028, %v405
    %v415 = vshrl.u32 2102212464, %v406
    %v416 = vor.u32 %v414, %v415
    %v417 = vshll.u32 2102212464, %v405
    %v418 = vshrl.u32 920167782, %v406
    %v419 = vor.u32 %v417, %v418
    %v420 = vshll.u32 920167782, %v405
    %v421 = vshrl.u32 1326507024, %v406
    %v422 = vor.u32 %v420, %v421
    %vm423 = vcmp.lt.s32.totalorder %v404, 1
    %vm424 = vcmp.lt.s32.totalorder %v404, 2
    %vm425 = vcmp.lt.s32.totalorder %v404, 3
    %vm426 = vcmp.lt.s32.totalorder %v404, 4
    %v427 = vsel %vm423, %v407, %v410
    %v428 = vsel %vm426, %v416, 2102212464
    %v429 = vsel %vm425, %v413, %v428
    %v430 = vsel %vm424, %v427, %v429
    %v431 = vsel %vm423, %v410, %v413
    %v432 = vsel %vm426, %v419, 920167782
    %v433 = vsel %vm425, %v416, %v432
    %v434 = vsel %vm424, %v431, %v433
    %v435 = vsel %vm423, %v413, %v416
    %v436 = vsel %vm426, %v422, 1326507024
    %v437 = vsel %vm425, %v419, %v436
    %v438 = vsel %vm424, %v435, %v437
    %v439 = vshll.u32 %v399, 8
    %v440 = vmul.u32.u64.compose %v439, %v438
    %v441 = vextract.low.u32 %v440
    %v442 = vextract.high.u32 %v440
    %v443 = vmul.u32.u64.compose %v439, %v434
    %v444 = vextract.low.u32 %v443
    %v445 = vextract.high.u32 %v443
    %v446 = vmul.u32 %v439, %v430
    %v447 = vadd.s32 %v442, %v444
    %vm448 = vc.u32 %v442, %v444
    %v449 = vadd.s32 %v445, 1
    %v450 = vsel %vm448, %v449, %v445
    %v451 = vadd.s32 %v446, %v450
    %v452 = vadd.s32 %v451, 536870912
    %v453 = vshrl.u32 %v452, 30
    %v454 = vshll.u32 %v453, 30
    %v455 = vsub.s32 %v451, %v454
    %vm456 = vcmp.lt.s32.totalorder %v455, 0
    %v457 = vsub.s32 0, %v455
    %v458 = vsel %vm456, %v457, %v455
    %v459 = vclz %v458
    %v460 = vsub.s32 %v459, 2
    %vm461 = vcmp.gt.s32.totalorder 0, %v460
    %v462 = vsel %vm461, 0, %v460
    %v463 = vsub.s32 32, %v462
    %v464 = vshll.u32 %v455, %v462
    %v465 = vshrl.u32 %v447, %v463
    %v466 = vor.u32 %v464, %v465
    %v467 = vsub.s32 4294967266, %v462
    %v468 = vadd.s32 %v467, 127
    %v469 = vshll.u32 %v468, 23
    %v470 = vor.u32 4788187, %v469
    %v471 = vand.u32 2147483647, %v470
    %v473 = vcvt.s32.f32 %v466
    %v474 = vmul.f32 %v473, %v471
    %v475 = vxor.u32 %v474, 2147483648
    %v476 = vsel %vm393, %v475, %v474
    %v477 = vsub.s32 4, %v453
    %v478 = vsel %vm393, %v477, %v453
    %v479 = vsel %vm392, %v78, %v476
    %v480 = vsel %vm392, 0, %v478
    %v481 = vcosq.f32.pop %v479
    %v482 = vsinq.f32.pop %v479
    %vm483 = vweird.f32 %v78
    %v484 = vadd.s32 %v480, 3
    %v485 = vand.u32 %v484, 3
    %vm486 = vcmp.lt.s32.totalorder %v485, 2
    %vm487 = vcmp.eq.s32.totalorder %v485, 0
    %v488 = vxor.u32 %v482, 2147483648
    %v489 = vsel %vm487, %v481, %v488
    %vm490 = vcmp.eq.s32.totalorder %v485, 2
    %v491 = vxor.u32 %v481, 2147483648
    %v492 = vsel %vm490, %v491, %v482
    %v493 = vsel %vm486, %v489, %v492
    %v494 = vsel %vm483, nan, %v493
    %495 = vst [vmem:[#allocation2 + $0x1] sm:$0xff] %v182
    %496 = vst [vmem:[#allocation2 + $0x9] sm:$0xff] %v286
    %497 = vst [vmem:[#allocation2 + $0x11] sm:$0xff] %v390
    %498 = vst [vmem:[#allocation2 + $0x19] sm:$0xff] %v494
    // Predicated region
    $region14: #{tpu_custom_call.1} parent=1 // pred_check
      _
    $region15: #{tpu_custom_call.1} parent=1 // pred_check_branch
      %500 = sbr.rel (0) target = $region17
    $region16: #{tpu_custom_call.1} parent=1 // pred_region
      %s502 = ssub.s32 640, 640
      %503 = vsyncadd [#allocation3], %s502
      %s504 = sshll.u32 [#allocation2], 4
      %s505 = int_to_ptr.vmem [resolvable:$true] %s504
      %510 = dma.vmem_to_hbm [thread:$0]  %s505, 640, %s3, [#allocation3], 128, 128, 8
    $region17: #{tpu_custom_call.1} parent=1 // pred_fallthru
      _
    // Predicated region
    $region18: #{tpu_custom_call.1} parent=1 // pred_check
      _
    $region19: #{tpu_custom_call.1} parent=1 // pred_check_branch
      %512 = sbr.rel (0) target = $region21
    $region20: #{tpu_custom_call.1} parent=1 // pred_region
      %513 = dma.done [#allocation3], 640
    $region21: #{tpu_custom_call.1} parent=1 // pred_fallthru
      _
    %514 = vsyncpa [#allocation3], 1

</llo_original>
